<compile_context>
chip_gen: v5e
topology: v5e:2x2
jax: 0.10.0
libtpu: 0.0.40
codegen_flags: <defaults>
</compile_context>

<pallas_src>
import jax
import jax.numpy as jnp
from jax.experimental import pallas as pl
from jax.experimental.pallas import tpu as pltpu


def _round_up(n: int, m: int) -> int:
    return ((n + m - 1) // m) * m


def _deep_proba_kernel(xT_ref, w1T_ref, b1T_ref, w2T_ref, b2_ref, o_ref):
    # xT_ref: (D, TB)    w1T_ref: (64, D)    b1T_ref: (64, 1)
    # w2T_ref: (1, 64)   b2_ref:  (1, 1) in SMEM     o_ref: (1, TB)
    xT = xT_ref[...]
    h = jnp.dot(w1T_ref[...], xT,
                preferred_element_type=jnp.float32)        # (64, TB)  MXU, N lane-wide
    h = jnp.maximum(h + b1T_ref[...], 0.0)                 # bias + ReLU (VPU)
    # TODO(synk): nn.Dropout(0.5) is identity in eval mode; training-mode stochastic
    # masking (pltpu.prng_random_bits + scale by 1/(1-p)=2.0) intentionally not applied.
    z = jnp.dot(w2T_ref[...], h,
                preferred_element_type=jnp.float32)        # (1, TB)  lane-dense
    z = z + b2_ref[0, 0]                                   # scalar bias from SMEM
    o_ref[...] = jax.nn.sigmoid(z)                         # exp stays on EUP


def deep_proba_forward(x, w1, b1, w2, b2, *, tb_max: int = 2048):
    """x: (B, in_shape) -> squeezed probabilities, matching torch.squeeze(sigmoid(...)).

    Params use the (in, out) layout: w1 (D, 64), b1 (1, 64), w2 (64, 1), b2 (1, 1)
    (numerically identical to PyTorch's x @ W.T with its (out, in) storage).
    """
    if x.dtype != jnp.float32:
        x = x.astype(jnp.float32)
    B, D = x.shape
    dim_h = w1.shape[1]

    # Batch tile: multiple of 128 (lane width), shrunk for small batches so padding
    # waste stays < 128 rows.  Pad B so the grid divides evenly (proven, masked-free path).
    tb_max = max(128, _round_up(tb_max, 128))
    TB = min(tb_max, _round_up(max(B, 1), 128))
    B_pad = _round_up(B, TB)
    if B_pad != B:
        x = jnp.pad(x, ((0, B_pad - B), (0, 0)))

    # Wrapper-side layout plumbing (single small relayout): batch onto the lane axis,
    # weights in (out, in).
    xT = x.T                              # (D, B_pad)
    w1T = w1.T                            # (64, D)
    b1T = b1.reshape(dim_h, 1)            # (64, 1)
    w2T = w2.T                            # (1, 64)
    b2 = b2.reshape(1, 1)                 # (1, 1) scalar

    # Advisory cost model: mem-bound on x, one transcendental (exp) per row.
    flops = 2 * B_pad * D * dim_h + 2 * B_pad * dim_h
    bytes_accessed = 4 * (B_pad * D + B_pad + D * dim_h + 2 * dim_h + 1)
    cost = pl.CostEstimate(flops=int(flops), transcendentals=int(B_pad),
                           bytes_accessed=int(bytes_accessed))

    grid = (B_pad // TB,)
    out = pl.pallas_call(
        _deep_proba_kernel,
        out_shape=jax.ShapeDtypeStruct((1, B_pad), jnp.float32),
        grid_spec=pl.GridSpec(
            grid=grid,
            in_specs=[
                pl.BlockSpec((D, TB), lambda i: (0, i)),            # x^T: batch-tiled, lane-dense
                pl.BlockSpec((dim_h, D), lambda i: (0, 0)),          # W1^T: VMEM-resident
                pl.BlockSpec((dim_h, 1), lambda i: (0, 0)),          # b1^T: VMEM-resident
                pl.BlockSpec((1, dim_h), lambda i: (0, 0)),          # W2^T: VMEM-resident
                pl.BlockSpec(memory_space=pltpu.MemorySpace.SMEM),   # b2: scalar path
            ],
            out_specs=pl.BlockSpec((1, TB), lambda i: (0, i)),       # lane-dense, unmasked stores
        ),
        compiler_params=pltpu.CompilerParams(
            dimension_semantics=("parallel",),   # v7x: batch grid sharded across both TCs
        ),
        cost_estimate=cost,
    )(xT, w1T, b1T, w2T, b2)

    # Glue: drop batch padding; squeeze mirrors torch.squeeze ((B,1)->(B,), (1,1)->()).
    return jnp.squeeze(out[0, :B])


def init_params(key, in_shape: int, dim_h: int = 64, out_shape: int = 1):
    """Deterministic init mimicking PyTorch's default Linear init (U[-1/sqrt(fan_in), +])."""
    k1, k2, k3, k4 = jax.random.split(key, 4)
    bound1 = 1.0 / (in_shape ** 0.5)
    bound2 = 1.0 / (dim_h ** 0.5)
    w1 = jax.random.uniform(k1, (in_shape, dim_h), jnp.float32, -bound1, bound1)
    b1 = jax.random.uniform(k2, (1, dim_h), jnp.float32, -bound1, bound1)
    w2 = jax.random.uniform(k3, (dim_h, out_shape), jnp.float32, -bound2, bound2)
    b2 = jax.random.uniform(k4, (1, out_shape), jnp.float32, -bound2, bound2)
    return w1, b1, w2, b2


if __name__ == "__main__":
    key = jax.random.PRNGKey(0)
    k_x, k_p, k_x2 = jax.random.split(key, 3)

    batch = 8
    in_shape = 4  # DeepProbaModel(in_shape=4)

    x = jax.random.normal(k_x, (batch, in_shape), dtype=jnp.float32)
    w1, b1, w2, b2 = init_params(k_p, in_shape)

    def ref_forward(xx):
        h_ref = jnp.maximum(xx @ w1 + b1, 0.0)
        return jnp.squeeze(jax.nn.sigmoid(h_ref @ w2 + b2))

    # Small batch (single grid step, padded 8 -> 128 internally).
    y = deep_proba_forward(x, w1, b1, w2, b2)
    jax.block_until_ready(y)
    assert y.shape == (batch,)
    assert jnp.allclose(y, ref_forward(x), atol=1e-5, rtol=1e-5)

    # Non-multiple-of-tile batch exercising a multi-step grid (TB=128 -> 3 tiles).
    batch2 = 300
    x2 = jax.random.normal(k_x2, (batch2, in_shape), dtype=jnp.float32)
    y2 = deep_proba_forward(x2, w1, b1, w2, b2, tb_max=128)
    jax.block_until_ready(y2)
    assert y2.shape == (batch2,)
    assert jnp.allclose(y2, ref_forward(x2), atol=1e-5, rtol=1e-5)

    print("KERNEL_OK")
</pallas_src>

<mosaic_0001>
module attributes {stable_mosaic.version = 11 : i64} {
  func.func @_deep_proba_kernel(%arg0: i32, %arg1: memref<4x128xf32, #tpu.memory_space<vmem>>, %arg2: memref<64x4xf32, #tpu.memory_space<vmem>>, %arg3: memref<64x1xf32, #tpu.memory_space<vmem>>, %arg4: memref<1x64xf32, #tpu.memory_space<vmem>>, %arg5: memref<1x1xf32, #tpu.memory_space<smem>>, %arg6: memref<1x128xf32, #tpu.memory_space<vmem>>) attributes {dimension_semantics = [#tpu.dimension_semantics<parallel>], iteration_bounds = array<i64: 1>, scalar_prefetch = 0 : i64, scratch_operands = 0 : i64, tpu.core_type = #tpu.core_type<tc>, window_params = [{transform_indices = @transform_0, window_bounds = array<i64: 4, 128>}, {pipeline_mode = #tpu.pipeline_mode<synchronous>, transform_indices = @transform_1, window_bounds = array<i64: 64, 4>}, {pipeline_mode = #tpu.pipeline_mode<synchronous>, transform_indices = @transform_2, window_bounds = array<i64: 64, 1>}, {pipeline_mode = #tpu.pipeline_mode<synchronous>, transform_indices = @transform_3, window_bounds = array<i64: 1, 64>}, {transform_indices = @transform_4, window_bounds = array<i64: 1, 1>}, {transform_indices = @transform_5, window_bounds = array<i64: 1, 128>}]} {
    %c0 = arith.constant 0 : index
    %c0_0 = arith.constant 0 : index
    %0 = vector.load %arg1[%c0, %c0_0] : memref<4x128xf32, #tpu.memory_space<vmem>>, vector<4x128xf32>
    %c0_1 = arith.constant 0 : index
    %c0_2 = arith.constant 0 : index
    %1 = vector.load %arg2[%c0_1, %c0_2] : memref<64x4xf32, #tpu.memory_space<vmem>>, vector<64x4xf32>
    %cst = arith.constant dense<0.000000e+00> : vector<64x128xf32>
    %2 = tpu.matmul %1, %0, %cst {dimension_numbers = #tpu.dot_dimension_numbers<[1], [0], [0], [1], [0, 0, 1, 1], [], []>} : vector<64x4xf32>, vector<4x128xf32>, vector<64x128xf32> -> vector<64x128xf32>
    %c0_3 = arith.constant 0 : index
    %c0_4 = arith.constant 0 : index
    %3 = vector.load %arg3[%c0_3, %c0_4] : memref<64x1xf32, #tpu.memory_space<vmem>>, vector<64x1xf32>
    %4 = vector.broadcast %3 : vector<64x1xf32> to vector<64x128xf32>
    %5 = arith.addf %2, %4 : vector<64x128xf32>
    %cst_5 = arith.constant 0.000000e+00 : f32
    %6 = vector.broadcast %cst_5 : f32 to vector<64x128xf32>
    %7 = arith.maximumf %5, %6 : vector<64x128xf32>
    %c0_6 = arith.constant 0 : index
    %c0_7 = arith.constant 0 : index
    %8 = vector.load %arg4[%c0_6, %c0_7] : memref<1x64xf32, #tpu.memory_space<vmem>>, vector<1x64xf32>
    %cst_8 = arith.constant dense<0.000000e+00> : vector<1x128xf32>
    %9 = tpu.matmul %8, %7, %cst_8 {dimension_numbers = #tpu.dot_dimension_numbers<[1], [0], [0], [1], [0, 0, 1, 1], [], []>} : vector<1x64xf32>, vector<64x128xf32>, vector<1x128xf32> -> vector<1x128xf32>
    %c0_9 = arith.constant 0 : index
    %c0_10 = arith.constant 0 : index
    %10 = memref.load %arg5[%c0_9, %c0_10] : memref<1x1xf32, #tpu.memory_space<smem>>
    %11 = vector.broadcast %10 : f32 to vector<1x128xf32>
    %12 = arith.addf %9, %11 : vector<1x128xf32>
    %13 = arith.negf %12 : vector<1x128xf32>
    %14 = math.exp %13 : vector<1x128xf32>
    %cst_11 = arith.constant 1.000000e+00 : f32
    %15 = vector.broadcast %cst_11 : f32 to vector<1x128xf32>
    %16 = arith.addf %15, %14 : vector<1x128xf32>
    %17 = arith.divf %15, %16 : vector<1x128xf32>
    %c0_12 = arith.constant 0 : index
    %c0_13 = arith.constant 0 : index
    %18 = vector.load %arg6[%c0_12, %c0_13] : memref<1x128xf32, #tpu.memory_space<vmem>>, vector<1x128xf32>
    tpu.vector_store %arg6[%c0_12, %c0_13], %17 {strides = array<i32>} : memref<1x128xf32, #tpu.memory_space<vmem>>, vector<1x128xf32>,
    return
  }
  func.func @transform_0(%arg0: i32) -> (i32, i32) {
    %c0_i32 = arith.constant 0 : i32
    %c0_i32_0 = arith.constant 0 : i32
    return %c0_i32, %arg0 : i32, i32
  }
  func.func @transform_1(%arg0: i32) -> (i32, i32) {
    %c0_i32 = arith.constant 0 : i32
    %c0_i32_0 = arith.constant 0 : i32
    %c0_i32_1 = arith.constant 0 : i32
    return %c0_i32, %c0_i32_0 : i32, i32
  }
  func.func @transform_2(%arg0: i32) -> (i32, i32) {
    %c0_i32 = arith.constant 0 : i32
    %c0_i32_0 = arith.constant 0 : i32
    %c0_i32_1 = arith.constant 0 : i32
    return %c0_i32, %c0_i32_0 : i32, i32
  }
  func.func @transform_3(%arg0: i32) -> (i32, i32) {
    %c0_i32 = arith.constant 0 : i32
    %c0_i32_0 = arith.constant 0 : i32
    %c0_i32_1 = arith.constant 0 : i32
    return %c0_i32, %c0_i32_0 : i32, i32
  }
  func.func @transform_4(%arg0: i32) -> (i32, i32) {
    %c0_i32 = arith.constant 0 : i32
    %c0_i32_0 = arith.constant 0 : i32
    %c0_i32_1 = arith.constant 0 : i32
    return %c0_i32, %c0_i32_0 : i32, i32
  }
  func.func @transform_5(%arg0: i32) -> (i32, i32) {
    %c0_i32 = arith.constant 0 : i32
    %c0_i32_0 = arith.constant 0 : i32
    return %c0_i32, %arg0 : i32, i32
  }
}

</mosaic_0001>

<llo_original>
// kernel: tpu_custom_call.1
$region0: #{tpu_custom_call.1}
  #allocation0 [shape = 'u32[]', space=smem, size = 0x4, offset = 0x4, fixed_abs, tag = 'smem constant byte address 0x4 - core index']
  #allocation1 [shape = 'u32[72,128]{1,0:T(1,128)}', space=vmem, size = 0x9000, scoped, tag = 'internal scratch']
  #allocation2 [shape = 'f32[1,1]{1,0:T(1,128)S(6)}', space=smem, size = 0x200, scoped, tag = 'scoped memory for tpu_custom_call.1']
  %s0 = inlined_call_operand.vmem [shape: f32[4,128], index: 0, kind: input, shape index: {}]
  %s1 = inlined_call_operand.vmem [shape: f32[64,4], index: 1, kind: input, shape index: {}]
  %s2 = inlined_call_operand.vmem [shape: f32[64,1], index: 2, kind: input, shape index: {}]
  %s3 = inlined_call_operand.vmem [shape: f32[1,64], index: 3, kind: input, shape index: {}]
  %s4 = inlined_call_operand.<no memory space> [shape: f32[1,1], index: 4, kind: input, shape index: {}]
  %s5 = inlined_call_operand.hbm [shape: f32[1,128], index: 5, kind: output, shape index: {}]
  %s6 = sld [smem:[#allocation0]]
  $region30: #{tpu_custom_call.1} parent=0
    _
  %s8 = ssub.s32 1, %s6
  %s9 = scalar_select 0, %s8, %s6
  %10 = sst [smem:[#allocation2]] %s4
  $region1: #{tpu_custom_call.1} parent=0
    #allocation3 [shape = 'u8[512]{0}', space=vmem, size = 0x400, scoped, tag = 'output window, operand 0, single buffered']
    #allocation4 [shape = 's32[1]{0}', space=sflag, size = 0x4, scoped, tag = 'scoped memory for tpu_custom_call.1']
    %11 = vsyncpa [#allocation4], 0
    // Predicated region
    $region2: #{tpu_custom_call.1} parent=1 // pred_check
      _
    $region3: #{tpu_custom_call.1} parent=1 // pred_check_branch
      %13 = sbr.rel (0) target = $region5
    $region4: #{tpu_custom_call.1} parent=1 // pred_region
      _
    $region5: #{tpu_custom_call.1} parent=1 // pred_fallthru
      _
    // Predicated region
    $region6: #{tpu_custom_call.1} parent=1 // pred_check
      _
    $region7: #{tpu_custom_call.1} parent=1 // pred_check_branch
      %15 = sbr.rel (0) target = $region9
    $region8: #{tpu_custom_call.1} parent=1 // pred_region
      _
    $region9: #{tpu_custom_call.1} parent=1 // pred_fallthru
      _
    // Predicated region
    $region10: #{tpu_custom_call.1} parent=1 // pred_check
      _
    $region11: #{tpu_custom_call.1} parent=1 // pred_check_branch
      %17 = sbr.rel (0) target = $region13
    $region12: #{tpu_custom_call.1} parent=1 // pred_region
      _
    $region13: #{tpu_custom_call.1} parent=1 // pred_fallthru
      _
    // Predicated region
    $region14: #{tpu_custom_call.1} parent=1 // pred_check
      _
    $region15: #{tpu_custom_call.1} parent=1 // pred_check_branch
      %19 = sbr.rel (0) target = $region17
    $region16: #{tpu_custom_call.1} parent=1 // pred_region
      _
    $region17: #{tpu_custom_call.1} parent=1 // pred_fallthru
      _
    // Predicated region
    $region18: #{tpu_custom_call.1} parent=1 // pred_check
      _
    $region19: #{tpu_custom_call.1} parent=1 // pred_check_branch
      %21 = sbr.rel (0) target = $region21
    $region20: #{tpu_custom_call.1} parent=1 // pred_region
      _
    $region21: #{tpu_custom_call.1} parent=1 // pred_fallthru
      _
    %v22 = vld [vmem:[%s0] sm:$0xf]
    %v23 = vld [vmem:[%s1] sm:$0xff]
    %v24 = vld [vmem:[%s1 + $0x8] sm:$0xff]
    %v25 = vld [vmem:[%s1 + $0x10] sm:$0xff]
    %v26 = vld [vmem:[%s1 + $0x18] sm:$0xff]
    %v27 = vld [vmem:[%s1 + $0x20] sm:$0xff]
    %v28 = vld [vmem:[%s1 + $0x28] sm:$0xff]
    %v29 = vld [vmem:[%s1 + $0x30] sm:$0xff]
    %v30 = vld [vmem:[%s1 + $0x38] sm:$0xff]
    %v31 = vld [vmem:[%s2] sm:$0xff]
    %v32 = vld [vmem:[%s2 + $0x8] sm:$0xff]
    %v33 = vld [vmem:[%s2 + $0x10] sm:$0xff]
    %v34 = vld [vmem:[%s2 + $0x18] sm:$0xff]
    %v35 = vld [vmem:[%s2 + $0x20] sm:$0xff]
    %v36 = vld [vmem:[%s2 + $0x28] sm:$0xff]
    %v37 = vld [vmem:[%s2 + $0x30] sm:$0xff]
    %v38 = vld [vmem:[%s2 + $0x38] sm:$0xff]
    %40 = vset.pattern.permute.xlu0 0
    %41 = vperm.xlu0 %40, %v31
    %v42 = vpop.permute.xlu0 %41
    %45 = vset.pattern.permute.xlu0 0
    %46 = vperm.xlu0 %45, %v32
    %v47 = vpop.permute.xlu0 %46
    %50 = vset.pattern.permute.xlu0 0
    %51 = vperm.xlu0 %50, %v33
    %v52 = vpop.permute.xlu0 %51
    %55 = vset.pattern.permute.xlu0 0
    %56 = vperm.xlu0 %55, %v34
    %v57 = vpop.permute.xlu0 %56
    %60 = vset.pattern.permute.xlu0 0
    %61 = vperm.xlu0 %60, %v35
    %v62 = vpop.permute.xlu0 %61
    %65 = vset.pattern.permute.xlu0 0
    %66 = vperm.xlu0 %65, %v36
    %v67 = vpop.permute.xlu0 %66
    %70 = vset.pattern.permute.xlu0 0
    %71 = vperm.xlu0 %70, %v37
    %v72 = vpop.permute.xlu0 %71
    %75 = vset.pattern.permute.xlu0 0
    %76 = vperm.xlu0 %75, %v38
    %v77 = vpop.permute.xlu0 %76
    %vm79 = vcmask 31744
    %v81 = vsel %vm79, %v23, 0
    %v84 = vsel %vm79, %v24, 0
    %v87 = vsel %vm79, %v25, 0
    %v90 = vsel %vm79, %v26, 0
    %v93 = vsel %vm79, %v27, 0
    %v96 = vsel %vm79, %v28, 0
    %v99 = vsel %vm79, %v29, 0
    %v102 = vsel %vm79, %v30, 0
    %vm104 = vcmask 1043456
    %v106 = vsel %vm104, %v22, 0
    %108 = vmatpush.msra.mxu0 0.0
    %109 = vmatpush.msra.mxu0 0.0
    %110 = vmatpush.msra.mxu0 0.0
    %111 = vmatpush.msra.mxu0 0.0
    %112 = vmatpush.msra.mxu0 0.0
    %113 = vmatpush.msra.mxu0 0.0
    %114 = vmatpush.msra.mxu0 0.0
    %115 = vmatpush.msra.mxu0 0.0
    %116 = vmatpush.msra.mxu0 0.0
    %117 = vmatpush.msra.mxu0 0.0
    %118 = vmatpush.msra.mxu0 0.0
    %119 = vmatpush.msra.mxu0 0.0
    %120 = vmatpush.msra.mxu0 0.0
    %121 = vmatpush.msra.mxu0 0.0
    %122 = vmatpush.msra.mxu0 0.0
    %123 = vmatpush.msra.mxu0 %v106
    %124 = vmatmul.f32.gmra.mxu0 %v81
    %v125 = vpop.f32.mrf.mxu0
    %v126 = vadd.f32 %v42, %v125
    %127 = vmatmul.f32.gmra.mxu0 %v84
    %v128 = vpop.f32.mrf.mxu0
    %v129 = vadd.f32 %v47, %v128
    %130 = vmatmul.f32.gmra.mxu0 %v87
    %v131 = vpop.f32.mrf.mxu0
    %v132 = vadd.f32 %v52, %v131
    %133 = vmatmul.f32.gmra.mxu0 %v90
    %v134 = vpop.f32.mrf.mxu0
    %v135 = vadd.f32 %v57, %v134
    %136 = vmatmul.f32.gmra.mxu0 %v93
    %v137 = vpop.f32.mrf.mxu0
    %v138 = vadd.f32 %v62, %v137
    %139 = vmatmul.f32.gmra.mxu0 %v96
    %v140 = vpop.f32.mrf.mxu0
    %v141 = vadd.f32 %v67, %v140
    %142 = vmatmul.f32.gmra.mxu0 %v99
    %v143 = vpop.f32.mrf.mxu0
    %v144 = vadd.f32 %v72, %v143
    %145 = vmatmul.f32.gmra.mxu0 %v102
    %v146 = vpop.f32.mrf.mxu0
    %v147 = vadd.f32 %v77, %v146
    %148 = vdwg.mxu0
    %v149 = vmax.f32 %v126, 0.0
    %v150 = vmax.f32 %v129, 0.0
    %v151 = vmax.f32 %v132, 0.0
    %v152 = vmax.f32 %v135, 0.0
    %v153 = vmax.f32 %v138, 0.0
    %v154 = vmax.f32 %v141, 0.0
    %v155 = vmax.f32 %v144, 0.0
    %v156 = vmax.f32 %v147, 0.0
    %v157 = vld [vmem:[%s3] sm:$0x1]
    %s158 = sld [smem:[#allocation2]]
    %v159 = vstv %s158
    %vm160 = vcmask 523264
    %v162 = vsel %vm160, %v157, 0
    %164 = vmatpush.msra.mxu0 0.0
    %165 = vmatpush.msra.mxu0 0.0
    %166 = vmatpush.msra.mxu0 0.0
    %167 = vmatpush.msra.mxu0 0.0
    %168 = vmatpush.msra.mxu0 0.0
    %169 = vmatpush.msra.mxu0 0.0
    %170 = vmatpush.msra.mxu0 0.0
    %171 = vmatpush.msra.mxu0 0.0
    %172 = vmatpush.msra.mxu0 %v156
    %173 = vmatpush.msra.mxu0 %v155
    %174 = vmatpush.msra.mxu0 %v154
    %175 = vmatpush.msra.mxu0 %v153
    %176 = vmatpush.msra.mxu0 %v152
    %177 = vmatpush.msra.mxu0 %v151
    %178 = vmatpush.msra.mxu0 %v150
    %179 = vmatpush.msra.mxu0 %v149
    %180 = vmatmul.f32.gmra.mxu0 %v162
    %v181 = vpop.f32.mrf.mxu0
    %v182 = vadd.f32 %v159, %v181
    %183 = vdwg.mxu0
    %v184 = vxor.u32 %v182, 2147483648
    %v185 = vmul.f32 %v184, 1.442695
    %v186 = vpow.pop %v185
    %v187 = vadd.f32 %v186, 1.0
    %v188 = vrcp.pop %v187
    %v189 = vmul.f32 %v187, %v188
    %v190 = vsub.f32 1.0, %v189
    %v191 = vmul.f32 %v188, %v190
    %v192 = vadd.f32 %v188, %v191
    %vm193 = vweird.f32 %v187
    %vm194 = vweird.f32 %v188
    %vm195 = vmor %vm193, %vm194
    %v196 = vsel %vm195, %v188, %v192
    %v197 = vand.u32 2147483647, %v187
    %vm198 = vcmp.eq.f32.partialorder %v197, 8.507059e+37
    %v199 = vand.u32 %v187, 2147483648
    %v200 = vor.u32 1.1754944e-38, %v199
    %v201 = vsel %vm198, %v200, %v196
    %v202 = vmul.f32 1.0, %v201
    %203 = vst [vmem:[#allocation3] sm:$0x1] %v202
    // Predicated region
    $region22: #{tpu_custom_call.1} parent=1 // pred_check
      _
    $region23: #{tpu_custom_call.1} parent=1 // pred_check_branch
      %205 = sbr.rel (0) target = $region25
    $region24: #{tpu_custom_call.1} parent=1 // pred_region
      %207 = vsyncadd [#allocation4], 0
      %s209 = sshll.u32 [#allocation3], 4
      %s210 = int_to_ptr.vmem [resolvable:$true] %s209
      %s211 = sshll.u32 %s5, 4
      %s212 = int_to_ptr.hbm [resolvable:$true] %s211
      %214 = dma.vmem_to_hbm [thread:$0]  %s210, 16, %s212, [#allocation4]
    $region25: #{tpu_custom_call.1} parent=1 // pred_fallthru
      _
    // Predicated region
    $region26: #{tpu_custom_call.1} parent=1 // pred_check
      _
    $region27: #{tpu_custom_call.1} parent=1 // pred_check_branch
      %216 = sbr.rel (0) target = $region29
    $region28: #{tpu_custom_call.1} parent=1 // pred_region
      %218 = dma.done [#allocation4], 16
    $region29: #{tpu_custom_call.1} parent=1 // pred_fallthru
      _
    %219 = vsyncpa [#allocation4], 1

</llo_original>
